<compile_context>
chip_gen: v6e
topology: v6e:2x2x1
jax: 0.10.0
libtpu: 0.0.40
codegen_flags: <defaults>
</compile_context>

<pallas_src>
import functools

import jax
import jax.numpy as jnp
from jax.experimental import pallas as pl
from jax.experimental.pallas import tpu as pltpu


_LANE_WIDTH = 1024            # lane-dense slab width (multiple of 128)
_TARGET_BLOCK_BYTES = 2 << 20  # ~2 MiB per block -> 4 x 2 MiB buffers = 8 MiB VMEM


def _envelope_kernel(x_ref, o_ref, *, p: int, a: float, b: float, c: float):
    x = x_ref[...]
    # Horner form: env = 1/x + x^(p-1) * (a + x*(b + c*x))
    # x**(p-1) with a static integer exponent lowers to lax.integer_pow (VPU).
    poly = a + x * (b + c * x)
    env_val = 1.0 / x + (x ** (p - 1)) * poly
    o_ref[...] = jnp.where(x < 1.0, env_val, jnp.zeros_like(x))


def envelope(x: jax.Array, exponent: int) -> jax.Array:
    """Apply the Envelope cutoff elementwise to an array of any shape."""
    p = exponent + 1
    a = -(p + 1) * (p + 2) / 2.0
    b = float(p * (p + 2))
    c = -p * (p + 1) / 2.0

    orig_shape = x.shape
    dtype = x.dtype
    total = x.size

    itemsize = jnp.dtype(dtype).itemsize
    # Sublane packing requirement: 8 rows for 4-byte, 16 for 2-byte, 32 for 1-byte.
    sublane = max(8, 32 // itemsize)

    width = _LANE_WIDTH
    rows = pl.cdiv(total, width)

    # ~2 MiB blocks, rounded down to a multiple of the sublane packing.
    block_rows = max(
        sublane,
        (_TARGET_BLOCK_BYTES // (width * itemsize)) // sublane * sublane,
    )
    # Small inputs: shrink the block to what is actually needed.
    block_rows = min(block_rows, pl.cdiv(rows, sublane) * sublane)
    # Pad the row count so the grid divides evenly (no hard divisibility assert).
    rows_padded = pl.cdiv(rows, block_rows) * block_rows
    padded_total = rows_padded * width

    flat = jnp.ravel(x)
    if padded_total != total:
        # Pad with 2.0 (> 1): envelope is exactly 0 there, no inf/nan generated.
        flat = jnp.concatenate(
            [flat, jnp.full((padded_total - total,), 2.0, dtype=dtype)]
        )
    x2d = flat.reshape(rows_padded, width)

    kernel = functools.partial(_envelope_kernel, p=p, a=a, b=b, c=c)

    out2d = pl.pallas_call(
        kernel,
        out_shape=jax.ShapeDtypeStruct((rows_padded, width), dtype),
        grid_spec=pl.GridSpec(
            grid=(rows_padded // block_rows,),
            in_specs=[pl.BlockSpec((block_rows, width), lambda i: (i, 0))],
            out_specs=pl.BlockSpec((block_rows, width), lambda i: (i, 0)),
        ),
        compiler_params=pltpu.CompilerParams(
            # Elementwise grid: every step independent -> megacore sharding on v7x.
            dimension_semantics=("parallel",),
        ),
    )(x2d)

    return out2d.reshape(-1)[:total].reshape(orig_shape)


def envelope_ref(x: jax.Array, exponent: int) -> jax.Array:
    """Pure-JAX reference matching the PyTorch forward exactly (direct form)."""
    p = exponent + 1
    a = -(p + 1) * (p + 2) / 2.0
    b = float(p * (p + 2))
    c = -p * (p + 1) / 2.0
    env_val = 1.0 / x + a * x ** (p - 1) + b * x ** p + c * x ** (p + 1)
    return jnp.where(x < 1.0, env_val, jnp.zeros_like(x))


if __name__ == "__main__":
    exponent = 5  # Envelope(exponent=5): p = 6 (typical DimeNet-style value)

    key = jax.random.PRNGKey(0)
    k1, k2 = jax.random.split(key)

    # Scaled distances in (0, 1.2] so some values exceed the cutoff (x >= 1).
    x = jax.random.uniform(
        k1, (16, 128), dtype=jnp.float32, minval=0.05, maxval=1.2
    )
    out = jax.block_until_ready(envelope(x, exponent))
    ref = envelope_ref(x, exponent)
    assert out.shape == x.shape and out.dtype == x.dtype
    # Horner regrouping may differ from the direct-form reference by a few f32
    # ulps of the largest intermediate term, hence the slightly relaxed atol.
    assert jnp.allclose(out, ref, rtol=1e-5, atol=5e-5)

    # Ragged shape (not a multiple of lanes or tiles) exercises the padding path.
    x2 = jax.random.uniform(
        k2, (37, 11), dtype=jnp.float32, minval=0.05, maxval=1.2
    )
    out2 = jax.block_until_ready(envelope(x2, exponent))
    ref2 = envelope_ref(x2, exponent)
    assert out2.shape == x2.shape and out2.dtype == x2.dtype
    assert jnp.allclose(out2, ref2, rtol=1e-5, atol=5e-5)

    print("KERNEL_OK")
</pallas_src>

<mosaic_0001>
module attributes {stable_mosaic.version = 11 : i64} {
  func.func @_envelope_kernel(%arg0: i32, %arg1: memref<8x1024xf32, #tpu.memory_space<vmem>>, %arg2: memref<8x1024xf32, #tpu.memory_space<vmem>>) attributes {dimension_semantics = [#tpu.dimension_semantics<parallel>], iteration_bounds = array<i64: 1>, scalar_prefetch = 0 : i64, scratch_operands = 0 : i64, tpu.core_type = #tpu.core_type<tc>, window_params = [{transform_indices = @transform_0, window_bounds = array<i64: 8, 1024>}, {transform_indices = @transform_1, window_bounds = array<i64: 8, 1024>}]} {
    %c0 = arith.constant 0 : index
    %c0_0 = arith.constant 0 : index
    %0 = vector.load %arg1[%c0, %c0_0] : memref<8x1024xf32, #tpu.memory_space<vmem>>, vector<8x1024xf32>
    %cst = arith.constant -2.100000e+01 : f32
    %1 = vector.broadcast %cst : f32 to vector<8x1024xf32>
    %2 = arith.mulf %1, %0 : vector<8x1024xf32>
    %cst_1 = arith.constant 4.800000e+01 : f32
    %3 = vector.broadcast %cst_1 : f32 to vector<8x1024xf32>
    %4 = arith.addf %3, %2 : vector<8x1024xf32>
    %5 = arith.mulf %0, %4 : vector<8x1024xf32>
    %cst_2 = arith.constant -2.800000e+01 : f32
    %6 = vector.broadcast %cst_2 : f32 to vector<8x1024xf32>
    %7 = arith.addf %6, %5 : vector<8x1024xf32>
    %cst_3 = arith.constant 1.000000e+00 : f32
    %8 = vector.broadcast %cst_3 : f32 to vector<8x1024xf32>
    %9 = arith.divf %8, %0 : vector<8x1024xf32>
    %10 = arith.mulf %0, %0 : vector<8x1024xf32>
    %11 = arith.mulf %10, %10 : vector<8x1024xf32>
    %12 = arith.mulf %0, %11 : vector<8x1024xf32>
    %13 = arith.mulf %12, %7 : vector<8x1024xf32>
    %14 = arith.addf %9, %13 : vector<8x1024xf32>
    %cst_4 = arith.constant 1.000000e+00 : f32
    %15 = vector.broadcast %cst_4 : f32 to vector<8x1024xf32>
    %16 = arith.cmpf olt, %0, %15 : vector<8x1024xf32>
    %cst_5 = arith.constant 0.000000e+00 : f32
    %17 = vector.broadcast %cst_5 : f32 to vector<8x1024xf32>
    %18 = arith.select %16, %14, %17 : vector<8x1024xi1>, vector<8x1024xf32>
    %c0_6 = arith.constant 0 : index
    %c0_7 = arith.constant 0 : index
    %19 = vector.load %arg2[%c0_6, %c0_7] : memref<8x1024xf32, #tpu.memory_space<vmem>>, vector<8x1024xf32>
    tpu.vector_store %arg2[%c0_6, %c0_7], %18 {strides = array<i32>} : memref<8x1024xf32, #tpu.memory_space<vmem>>, vector<8x1024xf32>,
    return
  }
  func.func @transform_0(%arg0: i32) -> (i32, i32) {
    %c0_i32 = arith.constant 0 : i32
    %c0_i32_0 = arith.constant 0 : i32
    return %arg0, %c0_i32 : i32, i32
  }
  func.func @transform_1(%arg0: i32) -> (i32, i32) {
    %c0_i32 = arith.constant 0 : i32
    %c0_i32_0 = arith.constant 0 : i32
    return %arg0, %c0_i32 : i32, i32
  }
}

</mosaic_0001>

<llo_original>
// kernel: tpu_custom_call.1
$region0: #{tpu_custom_call.1}
  #allocation0 [shape = 'u32[]', space=smem, size = 0x4, offset = 0x4, fixed_abs, tag = 'smem constant byte address 0x4 - core index']
  #allocation1 [shape = 'u32[144,128]{1,0:T(1,128)}', space=vmem, size = 0x12000, scoped, tag = 'internal scratch']
  %s0 = inlined_call_operand.hbm [shape: f32[8,1024], index: 0, kind: input, shape index: {}]
  %s1 = inlined_call_operand.hbm [shape: f32[8,1024], index: 1, kind: output, shape index: {}]
  %s2 = sld [smem:[#allocation0]]
  $region18: #{tpu_custom_call.1} parent=0
    _
  %s4 = ssub.s32 1, %s2
  %s5 = scalar_select 0, %s4, %s2
  $region1: #{tpu_custom_call.1} parent=0
    #allocation2 [shape = 'u8[32768]{0}', space=vmem, size = 0x8000, scoped, tag = 'input window, operand 0, single buffered']
    #allocation3 [shape = 's32[1]{0}', space=sflag, size = 0x4, scoped, tag = 'scoped memory for tpu_custom_call.1']
    #allocation4 [shape = 's32[1]{0}', space=sflag, size = 0x4, scoped, tag = 'scoped memory for tpu_custom_call.1']
    #allocation5 [shape = 'u8[32768]{0}', space=vmem, size = 0x8000, scoped, tag = 'output window, operand 0, single buffered']
    %6 = vsyncpa [#allocation3], 0
    %7 = vsyncpa [#allocation4], 0
    // Predicated region
    $region2: #{tpu_custom_call.1} parent=1 // pred_check
      _
    $region3: #{tpu_custom_call.1} parent=1 // pred_check_branch
      %9 = sbr.rel (0) target = $region5
    $region4: #{tpu_custom_call.1} parent=1 // pred_region
      %s11 = ssub.s32 1024, 1024
      %12 = vsyncadd [#allocation3], %s11
      %s14 = sshll.u32 [#allocation2], 4
      %s15 = int_to_ptr.vmem [resolvable:$true] %s14
      %17 = dma.hbm_to_vmem [thread:$0]  %s0, 1024, %s15, [#allocation3]
    $region5: #{tpu_custom_call.1} parent=1 // pred_fallthru
      _
    // Predicated region
    $region6: #{tpu_custom_call.1} parent=1 // pred_check
      _
    $region7: #{tpu_custom_call.1} parent=1 // pred_check_branch
      %19 = sbr.rel (0) target = $region9
    $region8: #{tpu_custom_call.1} parent=1 // pred_region
      %20 = dma.done [#allocation3], 1024
    $region9: #{tpu_custom_call.1} parent=1 // pred_fallthru
      _
    %v21 = vld [vmem:[#allocation2] sm:$0xff]
    %v22 = vld [vmem:[#allocation2 + $0x8] sm:$0xff]
    %v23 = vld [vmem:[#allocation2 + $0x10] sm:$0xff]
    %v24 = vld [vmem:[#allocation2 + $0x18] sm:$0xff]
    %v25 = vld [vmem:[#allocation2 + $0x20] sm:$0xff]
    %v26 = vld [vmem:[#allocation2 + $0x28] sm:$0xff]
    %v27 = vld [vmem:[#allocation2 + $0x30] sm:$0xff]
    %v28 = vld [vmem:[#allocation2 + $0x38] sm:$0xff]
    %v29 = vmul.f32 %v21, -21.0
    %v30 = vmul.f32 %v22, -21.0
    %v31 = vmul.f32 %v23, -21.0
    %v32 = vmul.f32 %v24, -21.0
    %v33 = vmul.f32 %v25, -21.0
    %v34 = vmul.f32 %v26, -21.0
    %v35 = vmul.f32 %v27, -21.0
    %v36 = vmul.f32 %v28, -21.0
    %v37 = vadd.f32 %v29, 48.0
    %v38 = vadd.f32 %v30, 48.0
    %v39 = vadd.f32 %v31, 48.0
    %v40 = vadd.f32 %v32, 48.0
    %v41 = vadd.f32 %v33, 48.0
    %v42 = vadd.f32 %v34, 48.0
    %v43 = vadd.f32 %v35, 48.0
    %v44 = vadd.f32 %v36, 48.0
    %v45 = vmul.f32 %v21, %v37
    %v46 = vmul.f32 %v22, %v38
    %v47 = vmul.f32 %v23, %v39
    %v48 = vmul.f32 %v24, %v40
    %v49 = vmul.f32 %v25, %v41
    %v50 = vmul.f32 %v26, %v42
    %v51 = vmul.f32 %v27, %v43
    %v52 = vmul.f32 %v28, %v44
    %v53 = vadd.f32 %v45, -28.0
    %v54 = vadd.f32 %v46, -28.0
    %v55 = vadd.f32 %v47, -28.0
    %v56 = vadd.f32 %v48, -28.0
    %v57 = vadd.f32 %v49, -28.0
    %v58 = vadd.f32 %v50, -28.0
    %v59 = vadd.f32 %v51, -28.0
    %v60 = vadd.f32 %v52, -28.0
    %v61 = vrcp.pop %v21
    %v62 = vmul.f32 1.0, %v61
    %v63 = vrcp.pop %v22
    %v64 = vmul.f32 1.0, %v63
    %v65 = vrcp.pop %v23
    %v66 = vmul.f32 1.0, %v65
    %v67 = vrcp.pop %v24
    %v68 = vmul.f32 1.0, %v67
    %v69 = vrcp.pop %v25
    %v70 = vmul.f32 1.0, %v69
    %v71 = vrcp.pop %v26
    %v72 = vmul.f32 1.0, %v71
    %v73 = vrcp.pop %v27
    %v74 = vmul.f32 1.0, %v73
    %v75 = vrcp.pop %v28
    %v76 = vmul.f32 1.0, %v75
    %v77 = vmul.f32 %v21, %v21
    %v78 = vmul.f32 %v22, %v22
    %v79 = vmul.f32 %v23, %v23
    %v80 = vmul.f32 %v24, %v24
    %v81 = vmul.f32 %v25, %v25
    %v82 = vmul.f32 %v26, %v26
    %v83 = vmul.f32 %v27, %v27
    %v84 = vmul.f32 %v28, %v28
    %v85 = vmul.f32 %v77, %v77
    %v86 = vmul.f32 %v78, %v78
    %v87 = vmul.f32 %v79, %v79
    %v88 = vmul.f32 %v80, %v80
    %v89 = vmul.f32 %v81, %v81
    %v90 = vmul.f32 %v82, %v82
    %v91 = vmul.f32 %v83, %v83
    %v92 = vmul.f32 %v84, %v84
    %v93 = vmul.f32 %v21, %v85
    %v94 = vmul.f32 %v22, %v86
    %v95 = vmul.f32 %v23, %v87
    %v96 = vmul.f32 %v24, %v88
    %v97 = vmul.f32 %v25, %v89
    %v98 = vmul.f32 %v26, %v90
    %v99 = vmul.f32 %v27, %v91
    %v100 = vmul.f32 %v28, %v92
    %v101 = vmul.f32 %v93, %v53
    %v102 = vmul.f32 %v94, %v54
    %v103 = vmul.f32 %v95, %v55
    %v104 = vmul.f32 %v96, %v56
    %v105 = vmul.f32 %v97, %v57
    %v106 = vmul.f32 %v98, %v58
    %v107 = vmul.f32 %v99, %v59
    %v108 = vmul.f32 %v100, %v60
    %v109 = vadd.f32 %v62, %v101
    %v110 = vadd.f32 %v64, %v102
    %v111 = vadd.f32 %v66, %v103
    %v112 = vadd.f32 %v68, %v104
    %v113 = vadd.f32 %v70, %v105
    %v114 = vadd.f32 %v72, %v106
    %v115 = vadd.f32 %v74, %v107
    %v116 = vadd.f32 %v76, %v108
    %vm117 = vcmp.lt.f32.partialorder %v21, 1.0
    %vm118 = vcmp.lt.f32.partialorder %v22, 1.0
    %vm119 = vcmp.lt.f32.partialorder %v23, 1.0
    %vm120 = vcmp.lt.f32.partialorder %v24, 1.0
    %vm121 = vcmp.lt.f32.partialorder %v25, 1.0
    %vm122 = vcmp.lt.f32.partialorder %v26, 1.0
    %vm123 = vcmp.lt.f32.partialorder %v27, 1.0
    %vm124 = vcmp.lt.f32.partialorder %v28, 1.0
    %v125 = vsel %vm117, %v109, 0.0
    %v126 = vsel %vm118, %v110, 0.0
    %v127 = vsel %vm119, %v111, 0.0
    %v128 = vsel %vm120, %v112, 0.0
    %v129 = vsel %vm121, %v113, 0.0
    %v130 = vsel %vm122, %v114, 0.0
    %v131 = vsel %vm123, %v115, 0.0
    %v132 = vsel %vm124, %v116, 0.0
    %133 = vst [vmem:[#allocation5] sm:$0xff] %v125
    %134 = vst [vmem:[#allocation5 + $0x8] sm:$0xff] %v126
    %135 = vst [vmem:[#allocation5 + $0x10] sm:$0xff] %v127
    %136 = vst [vmem:[#allocation5 + $0x18] sm:$0xff] %v128
    %137 = vst [vmem:[#allocation5 + $0x20] sm:$0xff] %v129
    %138 = vst [vmem:[#allocation5 + $0x28] sm:$0xff] %v130
    %139 = vst [vmem:[#allocation5 + $0x30] sm:$0xff] %v131
    %140 = vst [vmem:[#allocation5 + $0x38] sm:$0xff] %v132
    // Predicated region
    $region10: #{tpu_custom_call.1} parent=1 // pred_check
      _
    $region11: #{tpu_custom_call.1} parent=1 // pred_check_branch
      %142 = sbr.rel (0) target = $region13
    $region12: #{tpu_custom_call.1} parent=1 // pred_region
      %s144 = ssub.s32 1024, 1024
      %145 = vsyncadd [#allocation4], %s144
      %s147 = sshll.u32 [#allocation5], 4
      %s148 = int_to_ptr.vmem [resolvable:$true] %s147
      %150 = dma.vmem_to_hbm [thread:$0]  %s148, 1024, %s1, [#allocation4]
    $region13: #{tpu_custom_call.1} parent=1 // pred_fallthru
      _
    // Predicated region
    $region14: #{tpu_custom_call.1} parent=1 // pred_check
      _
    $region15: #{tpu_custom_call.1} parent=1 // pred_check_branch
      %152 = sbr.rel (0) target = $region17
    $region16: #{tpu_custom_call.1} parent=1 // pred_region
      %153 = dma.done [#allocation4], 1024
    $region17: #{tpu_custom_call.1} parent=1 // pred_fallthru
      _
    %154 = vsyncpa [#allocation3], 1
    %155 = vsyncpa [#allocation4], 1

</llo_original>
